<compile_context>
chip_gen: v7x
topology: tpu7x:2x2x1
jax: 0.10.0
libtpu: 0.0.40
codegen_flags: <defaults>
</compile_context>

<pallas_src>
import jax
import jax.numpy as jnp
from jax.experimental import pallas as pl
from jax.experimental.pallas import tpu as pltpu


def identity_dma_kernel(x_hbm_ref, o_hbm_ref, sem):
    # Single DMA-engine transfer HBM -> HBM: no VMEM staging, no vld/vst,
    # no grid iterations.
    copy = pltpu.make_async_copy(x_hbm_ref, o_hbm_ref, sem)
    copy.start()
    copy.wait()


def model_forward(x):
    """Identity forward. Returns an array equal to x via one HBM->HBM DMA."""
    return pl.pallas_call(
        identity_dma_kernel,
        out_shape=jax.ShapeDtypeStruct(x.shape, x.dtype),
        in_specs=[pl.BlockSpec(memory_space=pl.ANY)],   # leave input in HBM
        out_specs=pl.BlockSpec(memory_space=pl.ANY),    # write output in HBM
        scratch_shapes=[pltpu.SemaphoreType.DMA(())],   # DMA completion sem
    )(x)


if __name__ == "__main__":
    key = jax.random.PRNGKey(0)
    # Small deterministic input; identity accepts any shape — pick an aligned one.
    x = jax.random.normal(key, (8, 128), dtype=jnp.float32)

    y = model_forward(x)
    jax.block_until_ready(y)

    assert y.shape == x.shape and y.dtype == x.dtype
    assert bool(jnp.array_equal(y, x))
    print("KERNEL_OK")
</pallas_src>

<mosaic_0001>
module attributes {stable_mosaic.version = 11 : i64} {
  func.func @identity_dma_kernel(%arg0: memref<8x128xf32, #tpu.memory_space<any>>, %arg1: memref<8x128xf32, #tpu.memory_space<any>>, %arg2: memref<!tpu.dma_semaphore, #tpu.memory_space<semaphore_mem>>) attributes {dimension_semantics = [], scalar_prefetch = 0 : i64, scratch_operands = 1 : i64, tpu.core_type = #tpu.core_type<tc>} {
    tpu.enqueue_dma source(%arg0 : memref<8x128xf32, #tpu.memory_space<any>>) target(%arg1 : memref<8x128xf32, #tpu.memory_space<any>>) target_semaphore(%arg2 : memref<!tpu.dma_semaphore, #tpu.memory_space<semaphore_mem>>)
    tpu.wait_dma2 semaphore(%arg2 : memref<!tpu.dma_semaphore, #tpu.memory_space<semaphore_mem>>) src(%arg0 : memref<8x128xf32, #tpu.memory_space<any>>) dst(%arg1 : memref<8x128xf32, #tpu.memory_space<any>>)
    return
  }
}

</mosaic_0001>

<llo_original>
// kernel: tpu_custom_call.1
$region0: #{tpu_custom_call.1}
  #allocation0 [shape = 'u32[]', space=smem, size = 0x4, offset = 0x4, fixed_abs, tag = 'smem constant byte address 0x4 - core index']
  #allocation1 [shape = 'u32[144,128]{1,0:T(1,128)}', space=vmem, size = 0x12000, scoped, tag = 'internal scratch']
  #allocation2 [shape = 's32[1]{0}', space=sflag, size = 0x4, scoped, tag = 'scratch operand']
  #allocation3 [shape = 's32[]', space=sflag, size = 0x4, offset = 0, fixed_abs, tag = 'sflag constant byte address 0x0 - dummy sync flag']
  #allocation4 [shape = 'u32[0]{0}', space=smem, size = 0, offset = 0, fixed_abs, tag = 'smem constant byte address 0x0 - null']
  %s0 = inlined_call_operand.hbm [shape: f32[8,128], index: 0, kind: input, shape index: {}]
  %s1 = inlined_call_operand.hbm [shape: f32[8,128], index: 1, kind: output, shape index: {}]
  %s2 = sld [smem:[#allocation0]]
  $region2: #{tpu_custom_call.1} parent=0
    _
  %s4 = ssub.s32 1, %s2
  %s5 = scalar_select 0, %s4, %s2
  %s7 = sshll.u32 1, 14
  %s8 = sxor.u32 4294967295, %s7
  %s11 = sshll.u32 3, 24
  %s12 = sxor.u32 4294967295, %s11
  %s13 = sand.u32 0, %s12
  %s15 = sor.u32 %s13, 0
  %18 = dma.general %s0, 128, %s1, [#allocation2], [#allocation3], [#allocation4], %s15, 0
  %s19 = smul.u32 8, 1
  %s20 = sshll.u32 %s19, 4
  %21 = dma.done [#allocation2], %s20
  %22 = vsyncmov [#allocation2]
  %s23 = vpop.sfrf %22
  %p24 = scmp.eq.s32.totalorder %s23, 0
  %p25 = pneg %p24
  %27 = shalt.err (%p25)

</llo_original>
